<compile_context>
chip_gen: v7x
topology: tpu7x:2x2x1
jax: 0.10.0
libtpu: 0.0.40
codegen_flags: <defaults>
</compile_context>

<pallas_src>
import functools

import jax
import jax.numpy as jnp
from jax.experimental import pallas as pl
from jax.experimental.pallas import tpu as pltpu


_VMEM_BUDGET = 28 * 1024 * 1024  # double-buffered working-set target (fits 32 MiB scoped default)


def _proj_kernel(x_ref, w_ref, b_ref, o_ref, *, cast_operands_to_bf16):
    # x_ref: (tm, K)   w_ref: (K, tn) K-major   b_ref: (1, tn) f32   o_ref: (tm, tn)
    x = x_ref[...]
    w = w_ref[...]
    if cast_operands_to_bf16:
        if x.dtype == jnp.float32:
            x = x.astype(jnp.bfloat16)
        if w.dtype == jnp.float32:
            w = w.astype(jnp.bfloat16)
    acc = jax.lax.dot_general(
        x, w,
        dimension_numbers=(((1,), (0,)), ((), ())),   # standard (tm,K)@(K,tn), no transpose
        preferred_element_type=jnp.float32,
    )
    o_ref[...] = (acc + b_ref[...]).astype(o_ref.dtype)


def _align_down(v, align):
    return max(align, (v // align) * align)


def _pick_tile(dim, target, align):
    """Full dim if it fits the target, else the largest aligned tile <= target."""
    if dim <= target:
        return dim
    return _align_down(target, align)


@functools.partial(jax.jit, static_argnames=("tm", "tn", "cast_operands_to_bf16"))
def multimodal_projector(image_features, weight, bias, *, tm=512, tn=512,
                         cast_operands_to_bf16=True):
    """image_features: [B, S, H]; weight: [P, H] (PyTorch nn.Linear layout); bias: [P]."""
    B, S, H = image_features.shape
    P, H_w = weight.shape
    assert H == H_w, "weight in_features must match vision hidden size"

    M, K, N = B * S, H, P
    x2d = image_features.reshape(M, K)
    w_km = jnp.transpose(weight)                     # [K, N] K-major, transposed once
    b2d = bias.astype(jnp.float32).reshape(1, N)     # bias added in f32 (no per-tile cast)

    x_item = image_features.dtype.itemsize
    w_item = weight.dtype.itemsize
    o_item = x_item
    sublane = {1: 32, 2: 16}.get(x_item, 8)          # sublane packing per dtype

    def footprint(tm_, tn_):
        # Double-buffered VMEM working set: x tile + W tile + bias tile + out tile.
        return 2 * (tm_ * K * x_item + K * tn_ * w_item + tn_ * 4 + tm_ * tn_ * o_item)

    kernel = functools.partial(_proj_kernel,
                               cast_operands_to_bf16=cast_operands_to_bf16)

    # --- tile / grid selection -------------------------------------------------------
    tm_sel = _pick_tile(M, tm, sublane)

    # Preferred schedule: whole K-major weight VMEM-resident, 1-D grid over M.
    tm_full = tm_sel
    use_full_n = footprint(tm_full, N) <= _VMEM_BUDGET
    while (not use_full_n) and tm_full > 64:
        tm_full = _align_down(tm_full // 2, sublane)
        use_full_n = footprint(tm_full, N) <= _VMEM_BUDGET

    if use_full_n:
        tm_sel = tm_full
        m_tiles = pl.cdiv(M, tm_sel)
        # v7x has 2 TensorCores: keep >= 2 programs on the parallel axis if M allows.
        if m_tiles < 2 and M >= 2 * sublane:
            tm_sel = sublane * pl.cdiv(pl.cdiv(M, 2), sublane)
            m_tiles = pl.cdiv(M, tm_sel)
        grid = (m_tiles,)
        in_specs = [
            pl.BlockSpec((tm_sel, K), lambda m: (m, 0)),   # activation tile (full K)
            pl.BlockSpec((K, N), lambda m: (0, 0)),        # full weight, DMA'd once
            pl.BlockSpec((1, N), lambda m: (0, 0)),        # full bias, DMA'd once
        ]
        out_specs = pl.BlockSpec((tm_sel, N), lambda m: (m, 0))
        dim_sem = ("parallel",)
        bytes_accessed = (M * K * x_item + K * N * w_item + N * 4 + M * N * o_item)
        fp_final = footprint(tm_sel, N)
    else:
        # 2-D fallback: stream the larger operand exactly once (keyed to the outer axis).
        tn_sel = _pick_tile(N, tn, 128)
        while footprint(tm_sel, tn_sel) > _VMEM_BUDGET and tn_sel > 128:
            tn_sel = _align_down(tn_sel // 2, 128)
        while footprint(tm_sel, tn_sel) > _VMEM_BUDGET and tm_sel > 2 * sublane:
            tm_sel = _align_down(tm_sel // 2, sublane)
        m_tiles = pl.cdiv(M, tm_sel)
        n_tiles = pl.cdiv(N, tn_sel)
        if K * N * w_item >= M * K * x_item:
            # Weight dominates: each W tile fetched once; smaller activation slab revisited.
            grid = (n_tiles, m_tiles)
            x_map = lambda n, m: (m, 0)
            w_map = lambda n, m: (0, n)
            b_map = lambda n, m: (0, n)
            o_map = lambda n, m: (m, n)
            bytes_accessed = (n_tiles * M * K * x_item + K * N * w_item
                              + N * 4 + M * N * o_item)
        else:
            grid = (m_tiles, n_tiles)
            x_map = lambda m, n: (m, 0)
            w_map = lambda m, n: (0, n)
            b_map = lambda m, n: (0, n)
            o_map = lambda m, n: (m, n)
            bytes_accessed = (M * K * x_item + m_tiles * K * N * w_item
                              + N * 4 + M * N * o_item)
        in_specs = [
            pl.BlockSpec((tm_sel, K), x_map),              # activation tile (full K)
            pl.BlockSpec((K, tn_sel), w_map),              # K-major weight tile
            pl.BlockSpec((1, tn_sel), b_map),              # bias tile
        ]
        out_specs = pl.BlockSpec((tm_sel, tn_sel), o_map)
        dim_sem = ("parallel", "parallel")
        fp_final = footprint(tm_sel, tn_sel)

    cost = pl.CostEstimate(flops=2 * M * K * N, transcendentals=0,
                           bytes_accessed=int(bytes_accessed))
    # Explicit scoped-VMEM limit with headroom (v5e default is only 16 MiB; v7x physical 64 MiB).
    vmem_limit = int(min(max(fp_final * 3 // 2, 32 << 20), 48 << 20))

    out2d = pl.pallas_call(
        kernel,
        out_shape=jax.ShapeDtypeStruct((M, N), image_features.dtype),
        grid_spec=pltpu.PrefetchScalarGridSpec(
            num_scalar_prefetch=0,
            grid=grid,
            in_specs=in_specs,
            out_specs=out_specs,
        ),
        compiler_params=pltpu.CompilerParams(
            dimension_semantics=dim_sem,
            vmem_limit_bytes=vmem_limit,
        ),
        cost_estimate=cost,
    )(x2d, w_km, b2d)

    return out2d.reshape(B, S, N)


if __name__ == "__main__":
    key = jax.random.PRNGKey(0)
    kx, kw, kb = jax.random.split(key, 3)

    # Small synthetic config: vision hidden_size=128, projection_dim=256,
    # batch=2, num image patches=16.
    B, S, H, P = 2, 16, 128, 256
    x = jax.random.normal(kx, (B, S, H), dtype=jnp.float32)
    w = jax.random.normal(kw, (P, H), dtype=jnp.float32) * (1.0 / H ** 0.5)  # [out, in]
    b = jax.random.normal(kb, (P,), dtype=jnp.float32) * 0.01

    ref = x @ w.T + b

    # --- Test 1: bf16 I/O (deployment dtype), f32 accumulation. ---
    out_bf16 = multimodal_projector(
        x.astype(jnp.bfloat16), w.astype(jnp.bfloat16), b.astype(jnp.bfloat16))
    jax.block_until_ready(out_bf16)
    assert out_bf16.shape == (B, S, P)
    assert jnp.allclose(out_bf16.astype(jnp.float32), ref, atol=2.5e-2, rtol=2e-2)

    # --- Test 2: exact f32 path, ragged row count (M = 300 -> partial last M tile). ---
    B2, S2 = 3, 100
    x2 = jax.random.normal(kx, (B2, S2, H), dtype=jnp.float32)
    ref2 = x2 @ w.T + b
    out_f32 = multimodal_projector(x2, w, b, cast_operands_to_bf16=False)
    jax.block_until_ready(out_f32)
    assert out_f32.shape == (B2, S2, P)
    assert jnp.allclose(out_f32, ref2, atol=1e-3, rtol=1e-3)

    # --- Test 3: default fast path on f32 inputs (bf16 operands, f32 accumulate). ---
    out_fast = multimodal_projector(x2, w, b)
    jax.block_until_ready(out_fast)
    assert out_fast.shape == (B2, S2, P)
    assert jnp.allclose(out_fast, ref2, atol=3e-2, rtol=3e-2)

    print("KERNEL_OK")
</pallas_src>

<mosaic_0001>
module attributes {stable_mosaic.version = 11 : i64} {
  func.func @_proj_kernel(%arg0: i32, %arg1: memref<16x128xbf16, #tpu.memory_space<vmem>>, %arg2: memref<128x256xbf16, #tpu.memory_space<vmem>>, %arg3: memref<1x256xf32, #tpu.memory_space<vmem>>, %arg4: memref<16x256xbf16, #tpu.memory_space<vmem>>) attributes {dimension_semantics = [#tpu.dimension_semantics<parallel>], iteration_bounds = array<i64: 2>, scalar_prefetch = 0 : i64, scratch_operands = 0 : i64, tpu.core_type = #tpu.core_type<tc>, window_params = [{transform_indices = @transform_0, window_bounds = array<i64: 16, 128>}, {pipeline_mode = #tpu.pipeline_mode<synchronous>, transform_indices = @transform_1, window_bounds = array<i64: 128, 256>}, {pipeline_mode = #tpu.pipeline_mode<synchronous>, transform_indices = @transform_2, window_bounds = array<i64: 1, 256>}, {transform_indices = @transform_3, window_bounds = array<i64: 16, 256>}]} {
    %c0 = arith.constant 0 : index
    %c0_0 = arith.constant 0 : index
    %0 = vector.load %arg1[%c0, %c0_0] : memref<16x128xbf16, #tpu.memory_space<vmem>>, vector<16x128xbf16>
    %c0_1 = arith.constant 0 : index
    %c0_2 = arith.constant 0 : index
    %1 = vector.load %arg2[%c0_1, %c0_2] : memref<128x256xbf16, #tpu.memory_space<vmem>>, vector<128x256xbf16>
    %cst = arith.constant dense<0.000000e+00> : vector<16x256xf32>
    %2 = tpu.matmul %0, %1, %cst {dimension_numbers = #tpu.dot_dimension_numbers<[1], [0], [0], [1], [0, 0, 1, 1], [], []>} : vector<16x128xbf16>, vector<128x256xbf16>, vector<16x256xf32> -> vector<16x256xf32>
    %c0_3 = arith.constant 0 : index
    %c0_4 = arith.constant 0 : index
    %3 = vector.load %arg3[%c0_3, %c0_4] : memref<1x256xf32, #tpu.memory_space<vmem>>, vector<1x256xf32>
    %4 = vector.broadcast %3 : vector<1x256xf32> to vector<16x256xf32>
    %5 = arith.addf %2, %4 : vector<16x256xf32>
    %6 = arith.truncf %5 : vector<16x256xf32> to vector<16x256xbf16>
    %c0_5 = arith.constant 0 : index
    %c0_6 = arith.constant 0 : index
    %7 = vector.load %arg4[%c0_5, %c0_6] : memref<16x256xbf16, #tpu.memory_space<vmem>>, vector<16x256xbf16>
    tpu.vector_store %arg4[%c0_5, %c0_6], %6 {strides = array<i32>} : memref<16x256xbf16, #tpu.memory_space<vmem>>, vector<16x256xbf16>,
    return
  }
  func.func @transform_0(%arg0: i32) -> (i32, i32) {
    %c0_i32 = arith.constant 0 : i32
    %c0_i32_0 = arith.constant 0 : i32
    return %arg0, %c0_i32 : i32, i32
  }
  func.func @transform_1(%arg0: i32) -> (i32, i32) {
    %c0_i32 = arith.constant 0 : i32
    %c0_i32_0 = arith.constant 0 : i32
    %c0_i32_1 = arith.constant 0 : i32
    return %c0_i32, %c0_i32_0 : i32, i32
  }
  func.func @transform_2(%arg0: i32) -> (i32, i32) {
    %c0_i32 = arith.constant 0 : i32
    %c0_i32_0 = arith.constant 0 : i32
    %c0_i32_1 = arith.constant 0 : i32
    return %c0_i32, %c0_i32_0 : i32, i32
  }
  func.func @transform_3(%arg0: i32) -> (i32, i32) {
    %c0_i32 = arith.constant 0 : i32
    %c0_i32_0 = arith.constant 0 : i32
    return %arg0, %c0_i32 : i32, i32
  }
}

</mosaic_0001>

<llo_original>
// kernel: multimodal_projector.1
$region0: #{multimodal_projector.1}
  #allocation0 [shape = 'u32[]', space=smem, size = 0x4, offset = 0x4, fixed_abs, tag = 'smem constant byte address 0x4 - core index']
  #allocation1 [shape = 'u32[144,128]{1,0:T(1,128)}', space=vmem, size = 0x12000, scoped, tag = 'internal scratch']
  %s0 = inlined_call_operand.vmem [shape: bf16[32,128], index: 0, kind: input, shape index: {}]
  %s1 = inlined_call_operand.vmem [shape: bf16[128,256], index: 1, kind: input, shape index: {}]
  %s2 = inlined_call_operand.vmem [shape: f32[1,256], index: 2, kind: input, shape index: {}]
  %s3 = inlined_call_operand.hbm [shape: bf16[32,256], index: 3, kind: output, shape index: {}]
  %s4 = sld [smem:[#allocation0]]
  $region45: #{multimodal_projector.1} parent=0
    _
  %s6 = ssub.s32 1, %s4
  %s7 = scalar_select 0, %s6, %s4
  $region1: #{multimodal_projector.1} parent=0
    #allocation2 [shape = 'u8[16384]{0}', space=vmem, size = 0x4000, scoped, tag = 'output window, operand 0']
    #allocation3 [shape = 's32[2]{0}', space=sflag, size = 0x8, scoped, tag = 'scoped memory for multimodal_projector.1']
    %8 = vsyncpa [#allocation3], 0
    %s9 = scalar_lea.sflag [#allocation3], 1
    %10 = vsyncpa %s9, 0
    loop: start=0, step=1, limit=4
    $region2: #{multimodal_projector.1} parent=1 // loop_pre_header
      _
    $region3: #{multimodal_projector.1} parent=1 // loop_header
      %s12 = sphi 0, %s16
      %p13 = scmp.ge.s32.totalorder %s12, 4
      %s22 = sphi 0, %s24
      %s25 = sphi 0, %s22
      %s26 = sphi 0, %s25
      %s42 = sphi 0, %s26
      %s46 = sphi 0, %s46
      %s48 = sphi 0, %s46
      %s49 = sphi 0, %s48
      %s63 = sphi 0, %s49
      %s67 = sphi 0, %s67
      %s69 = sphi 0, %s67
      %s70 = sphi 0, %s69
      %s84 = sphi 0, %s70
      %s90 = sphi 0, %s92
      %s93 = sphi 0, %s90
      %s94 = sphi 0, %s93
      %s110 = sphi 0, %s94
    $region4: #{multimodal_projector.1} parent=1 // loop_header_branch
      %15 = sbr.rel (%p13) target = $region8
    $region5: #{multimodal_projector.1} parent=1 // loop_body
      %s17 = ssub.s32 %s12, 1
      %s18 = ssub.s32 %s12, 2
      %s19 = sadd.s32 %s12, 1
      %s20 = ssub.s32 %s12, %s19
      %p21 = scmp.eq.s32.totalorder %s20, 0
      %s23 = sadd.s32 %s22, 1
      %s24 = scalar_select %p21, %s22, %s23
      %p27 = pneg %p21
      %p28 = scmp.eq.s32.totalorder %s12, 1
      %p29 = por %p27, %p28
      %p30 = scmp.ne.s32.totalorder %s22, %s25
      %p31 = scmp.eq.s32.totalorder %s12, 0
      %p32 = por %p30, %p31
      %p33 = scmp.ne.s32.totalorder %s22, %s25
      %p34 = scmp.eq.s32.totalorder %s17, 1
      %p35 = por %p33, %p34
      %p36 = scmp.ne.s32.totalorder %s25, %s26
      %p37 = scmp.eq.s32.totalorder %s17, 0
      %p38 = por %p36, %p37
      %p39 = scmp.ne.s32.totalorder %s25, %s26
      %p40 = scmp.eq.s32.totalorder %s18, 1
      %p41 = por %p39, %p40
      %p43 = scmp.ne.s32.totalorder %s26, %s42
      %p44 = scmp.eq.s32.totalorder %s18, 0
      %p45 = por %p43, %p44
      %s47 = sadd.s32 %s46, 1
      %p50 = scmp.eq.s32.totalorder %s12, 1
      %p51 = scmp.ne.s32.totalorder %s46, %s48
      %p52 = scmp.eq.s32.totalorder %s12, 0
      %p53 = por %p51, %p52
      %p54 = scmp.ne.s32.totalorder %s46, %s48
      %p55 = scmp.eq.s32.totalorder %s17, 1
      %p56 = por %p54, %p55
      %p57 = scmp.ne.s32.totalorder %s48, %s49
      %p58 = scmp.eq.s32.totalorder %s17, 0
      %p59 = por %p57, %p58
      %p60 = scmp.ne.s32.totalorder %s48, %s49
      %p61 = scmp.eq.s32.totalorder %s18, 1
      %p62 = por %p60, %p61
      %p64 = scmp.ne.s32.totalorder %s49, %s63
      %p65 = scmp.eq.s32.totalorder %s18, 0
      %p66 = por %p64, %p65
      %s68 = sadd.s32 %s67, 1
      %p71 = scmp.eq.s32.totalorder %s12, 1
      %p72 = scmp.ne.s32.totalorder %s67, %s69
      %p73 = scmp.eq.s32.totalorder %s12, 0
      %p74 = por %p72, %p73
      %p75 = scmp.ne.s32.totalorder %s67, %s69
      %p76 = scmp.eq.s32.totalorder %s17, 1
      %p77 = por %p75, %p76
      %p78 = scmp.ne.s32.totalorder %s69, %s70
      %p79 = scmp.eq.s32.totalorder %s17, 0
      %p80 = por %p78, %p79
      %p81 = scmp.ne.s32.totalorder %s69, %s70
      %p82 = scmp.eq.s32.totalorder %s18, 1
      %p83 = por %p81, %p82
      %p85 = scmp.ne.s32.totalorder %s70, %s84
      %p86 = scmp.eq.s32.totalorder %s18, 0
      %p87 = por %p85, %p86
      %s88 = ssub.s32 %s12, %s19
      %p89 = scmp.eq.s32.totalorder %s88, 0
      %s91 = sadd.s32 %s90, 1
      %s92 = scalar_select %p89, %s90, %s91
      %p95 = pneg %p89
      %p96 = scmp.eq.s32.totalorder %s12, 1
      %p97 = por %p95, %p96
      %p98 = scmp.ne.s32.totalorder %s90, %s93
      %p99 = scmp.eq.s32.totalorder %s12, 0
      %p100 = por %p98, %p99
      %p101 = scmp.ne.s32.totalorder %s90, %s93
      %p102 = scmp.eq.s32.totalorder %s17, 1
      %p103 = por %p101, %p102
      %p104 = scmp.ne.s32.totalorder %s93, %s94
      %p105 = scmp.eq.s32.totalorder %s17, 0
      %p106 = por %p104, %p105
      %p107 = scmp.ne.s32.totalorder %s93, %s94
      %p108 = scmp.eq.s32.totalorder %s18, 1
      %p109 = por %p107, %p108
      %p111 = scmp.ne.s32.totalorder %s94, %s110
      %p112 = scmp.eq.s32.totalorder %s18, 0
      %p113 = por %p111, %p112
      %p114 = scmp.le.s32.totalorder 1, %s12
      %p115 = scmp.lt.s32.totalorder %s12, 3
      %p116 = pnand %p114, %p115
      %p117 = pneg %p116
      // Predicated region
      $region9: #{multimodal_projector.1} parent=5 // pred_check
        _
      $region10: #{multimodal_projector.1} parent=5 // pred_check_branch
        %119 = sbr.rel (%p116) target = $region12
      $region11: #{multimodal_projector.1} parent=5 // pred_region
        %s120 = ssub.s32 %s12, 1
        // Predicated region
        $region13: #{multimodal_projector.1} parent=11 // pred_check
          %p121 = pneg %p59
        $region14: #{multimodal_projector.1} parent=11 // pred_check_branch
          %123 = sbr.rel (%p121) target = $region16
        $region15: #{multimodal_projector.1} parent=11 // pred_region
          _
        $region16: #{multimodal_projector.1} parent=11 // pred_fallthru
          _
        // Predicated region
        $region17: #{multimodal_projector.1} parent=11 // pred_check
          %p124 = pneg %p80
        $region18: #{multimodal_projector.1} parent=11 // pred_check_branch
          %126 = sbr.rel (%p124) target = $region20
        $region19: #{multimodal_projector.1} parent=11 // pred_region
          _
        $region20: #{multimodal_projector.1} parent=11 // pred_fallthru
          _
      $region12: #{multimodal_projector.1} parent=5 // pred_fallthru
        _
      %p127 = scmp.lt.s32.totalorder %s12, 2
      // Predicated region
      $region21: #{multimodal_projector.1} parent=5 // pred_check
        %p128 = pneg %p127
      $region22: #{multimodal_projector.1} parent=5 // pred_check_branch
        %130 = sbr.rel (%p128) target = $region24
      $region23: #{multimodal_projector.1} parent=5 // pred_region
        // Predicated region
        $region25: #{multimodal_projector.1} parent=23 // pred_check
          %p131 = pneg %p32
        $region26: #{multimodal_projector.1} parent=23 // pred_check_branch
          %133 = sbr.rel (%p131) target = $region28
        $region27: #{multimodal_projector.1} parent=23 // pred_region
          %s134 = smul.u32 2, %s12
          %p135 = scmp.lt.s32.totalorder %s134, 3
          %s136 = scalar_select %p135, %s134, 3
          %s137 = smul.addr %s136, 4
          %s138 = scalar_lea.vmem %s0, %s137
          %s139 = smul.u32 2, %s12
        $region28: #{multimodal_projector.1} parent=23 // pred_fallthru
          _
      $region24: #{multimodal_projector.1} parent=5 // pred_fallthru
        _
      %p140 = scmp.le.s32.totalorder 1, %s12
      %p141 = scmp.lt.s32.totalorder %s12, 3
      %p142 = pnand %p140, %p141
      %p143 = pneg %p142
      // Predicated region
      $region29: #{multimodal_projector.1} parent=5 // pred_check
        _
      $region30: #{multimodal_projector.1} parent=5 // pred_check_branch
        %145 = sbr.rel (%p142) target = $region32
      $region31: #{multimodal_projector.1} parent=5 // pred_region
        %s146 = ssub.s32 %s12, 1
        %s147 = smul.u32 2, %s17
        %p148 = scmp.lt.s32.totalorder %s147, 3
        %s149 = scalar_select %p148, %s147, 3
        %s150 = smul.addr %s149, 4
        %s151 = scalar_lea.vmem %s0, %s150
        %p152 = pneg %p38
        %p153 = pneg %p35
        %p154 = pneg %p59
        %p155 = pneg %p56
        %p156 = pneg %p80
        %p157 = pneg %p77
        %p158 = pneg %p106
        %p159 = pneg %p103
        %s160 = sand.u32 %s93, 1
        %s161 = scalar_lea.sflag [#allocation3], %s160
        %s162 = sand.u32 %s93, 1
        %s163 = smul.addr %s162, 16
        %s164 = scalar_lea.vmem [#allocation2], %s163
        %s165 = smul.u32 2, %s17
        %p166 = scmp.lt.s32.totalorder %s165, 3
        %s167 = scalar_select %p166, %s165, 3
        %s168 = smul.addr %s167, 4
        %s169 = scalar_lea.vmem %s0, %s168
        %s170 = smul.u32 2, %s17
        %s171 = smul.u32 2, %s17
        %v173 = vld [vmem:[%s169] sm:$0xf]
        %v174 = vld [vmem:[%s169 + $0x4] sm:$0xf]
        %v175 = vld [vmem:[%s1] sm:$0xff]
        %v176 = vld [vmem:[%s1 + $0x8] sm:$0xff]
        %v177 = vld [vmem:[%s1 + $0x10] sm:$0xff]
        %v178 = vld [vmem:[%s1 + $0x18] sm:$0xff]
        %v179 = vld [vmem:[%s1 + $0x20] sm:$0xff]
        %v180 = vld [vmem:[%s1 + $0x28] sm:$0xff]
        %v181 = vld [vmem:[%s1 + $0x30] sm:$0xff]
        %v182 = vld [vmem:[%s1 + $0x38] sm:$0xff]
        %v183 = vld [vmem:[%s1 + $0x40] sm:$0xff]
        %v184 = vld [vmem:[%s1 + $0x48] sm:$0xff]
        %v185 = vld [vmem:[%s1 + $0x50] sm:$0xff]
        %v186 = vld [vmem:[%s1 + $0x58] sm:$0xff]
        %v187 = vld [vmem:[%s1 + $0x60] sm:$0xff]
        %v188 = vld [vmem:[%s1 + $0x68] sm:$0xff]
        %v189 = vld [vmem:[%s1 + $0x70] sm:$0xff]
        %v190 = vld [vmem:[%s1 + $0x78] sm:$0xff]
        %v191 = vld [vmem:[%s2] sm:$0x3]
        %v193 = vlaneseq
        %v194 = vshrl.u32 %v193, 7
        %v195 = vsub.s32 0, %v194
        %v196 = vrot.slane %v191, %v195
        %v197 = vlaneseq
        %v198 = vshrl.u32 %v197, 7
        %v199 = vsub.s32 1, %v198
        %v200 = vrot.slane %v191, %v199
        %v205 = vunpack.c.l.b16 %v173
        %v206 = vunpack.c.l.b16 %v174
        %v207 = vpack.c.b16 %v206, %v205
        %v225 = vunpack.c.l.b16 %v175
        %v226 = vunpack.c.h.b16 %v175
        %v227 = vunpack.c.l.b16 %v176
        %v228 = vunpack.c.h.b16 %v176
        %v229 = vunpack.c.l.b16 %v177
        %v230 = vunpack.c.h.b16 %v177
        %v231 = vunpack.c.l.b16 %v178
        %v232 = vunpack.c.h.b16 %v178
        %v233 = vunpack.c.l.b16 %v179
        %v234 = vunpack.c.h.b16 %v179
        %v235 = vunpack.c.l.b16 %v180
        %v236 = vunpack.c.h.b16 %v180
        %v237 = vunpack.c.l.b16 %v181
        %v238 = vunpack.c.h.b16 %v181
        %v239 = vunpack.c.l.b16 %v182
        %v240 = vunpack.c.h.b16 %v182
        %v241 = vunpack.c.l.b16 %v183
        %v242 = vunpack.c.h.b16 %v183
        %v243 = vunpack.c.l.b16 %v184
        %v244 = vunpack.c.h.b16 %v184
        %v245 = vunpack.c.l.b16 %v185
        %v246 = vunpack.c.h.b16 %v185
        %v247 = vunpack.c.l.b16 %v186
        %v248 = vunpack.c.h.b16 %v186
        %v249 = vunpack.c.l.b16 %v187
        %v250 = vunpack.c.h.b16 %v187
        %v251 = vunpack.c.l.b16 %v188
        %v252 = vunpack.c.h.b16 %v188
        %v253 = vunpack.c.l.b16 %v189
        %v254 = vunpack.c.h.b16 %v189
        %v255 = vunpack.c.l.b16 %v190
        %v256 = vunpack.c.h.b16 %v190
        %v257 = vpack.c.b16 %v227, %v225
        %v258 = vpack.c.b16 %v228, %v226
        %v259 = vpack.c.b16 %v231, %v229
        %v260 = vpack.c.b16 %v232, %v230
        %v261 = vpack.c.b16 %v235, %v233
        %v262 = vpack.c.b16 %v236, %v234
        %v263 = vpack.c.b16 %v239, %v237
        %v264 = vpack.c.b16 %v240, %v238
        %v265 = vpack.c.b16 %v243, %v241
        %v266 = vpack.c.b16 %v244, %v242
        %v267 = vpack.c.b16 %v247, %v245
        %v268 = vpack.c.b16 %v248, %v246
        %v269 = vpack.c.b16 %v251, %v249
        %v270 = vpack.c.b16 %v252, %v250
        %v271 = vpack.c.b16 %v255, %v253
        %v272 = vpack.c.b16 %v256, %v254
        %289 = vmatprep.subr.bf16.mxu0 %v258
        %290 = vmatpush1.bf16.msra.mxu0 %v257
        %291 = vmatprep.subr.bf16.mxu0 %v260
        %292 = vmatpush1.bf16.msra.mxu0 %v259
        %293 = vmatprep.subr.bf16.mxu0 %v262
        %294 = vmatpush1.bf16.msra.mxu0 %v261
        %295 = vmatprep.subr.bf16.mxu0 %v264
        %296 = vmatpush1.bf16.msra.mxu0 %v263
        %297 = vmatprep.subr.bf16.mxu0 %v266
        %298 = vmatpush1.bf16.msra.mxu0 %v265
        %299 = vmatprep.subr.bf16.mxu0 %v268
        %300 = vmatpush1.bf16.msra.mxu0 %v267
        %301 = vmatprep.subr.bf16.mxu0 %v270
        %302 = vmatpush1.bf16.msra.mxu0 %v269
        %303 = vmatprep.subr.bf16.mxu0 %v272
        %304 = vmatpush1.bf16.msra.mxu0 %v271
        %305 = vmatprep.subr.bf16.mxu0 0
        %306 = vmatpush1.bf16.msra.mxu0 0
        %307 = vmatprep.subr.bf16.mxu0 0
        %308 = vmatpush1.bf16.msra.mxu0 0
        %309 = vmatprep.subr.bf16.mxu0 0
        %310 = vmatpush1.bf16.msra.mxu0 0
        %311 = vmatprep.subr.bf16.mxu0 0
        %312 = vmatpush1.bf16.msra.mxu0 0
        %313 = vmatprep.subr.bf16.mxu0 0
        %314 = vmatpush1.bf16.msra.mxu0 0
        %315 = vmatprep.subr.bf16.mxu0 0
        %316 = vmatpush1.bf16.msra.mxu0 0
        %317 = vmatprep.subr.bf16.mxu0 0
        %318 = vmatpush1.bf16.msra.mxu0 0
        %319 = vmatprep.subr.bf16.mxu0 0
        %320 = vmatpush1.bf16.msra.mxu0 0
        %321 = vmatprep.mubr.bf16.mxu0 0
        %322 = vmatmul.mubr.bf16.gmra.mrb[0].mxu0 %v207
        %v323 = vpop.f32.mrb[0].mxu0
        %v324 = vadd.f32 %v196, %v323
        %v325 = vpop.f32.mrb[0].mxu0
        %v326 = vadd.f32 %v200, %v325
        %v327 = vpop.f32.mrb[0].mxu0
        %v328 = vadd.f32 %v196, %v327
        %v329 = vpop.f32.mrb[0].mxu0
        %v330 = vadd.f32 %v200, %v329
        %331 = vdwg.mxu0
        %v332 = vpack.c.bf16 %v328, %v324
        %v333 = vpack.c.bf16 %v330, %v326
        %v336 = vunpack.c.l.b16 %v332
        %v337 = vunpack.c.l.b16 %v333
        %v338 = vunpack.c.h.b16 %v332
        %v339 = vunpack.c.h.b16 %v333
        %v340 = vpack.c.b16 %v337, %v336
        %v341 = vpack.c.b16 %v339, %v338
        %344 = vst [vmem:[%s164] sm:$0xff] %v340
        %345 = vst [vmem:[%s164 + $0x8] sm:$0xff] %v341
        %s346 = sand.u32 %s93, 1
        %s347 = scalar_lea.sflag [#allocation3], %s346
        %s348 = sand.u32 %s93, 1
        %s349 = smul.addr %s348, 16
        %s350 = scalar_lea.vmem [#allocation2], %s349
        // Predicated region
        $region33: #{multimodal_projector.1} parent=31 // pred_check
          %p351 = pneg %p103
        $region34: #{multimodal_projector.1} parent=31 // pred_check_branch
          %353 = sbr.rel (%p351) target = $region36
        $region35: #{multimodal_projector.1} parent=31 // pred_region
          %s354 = smul.u32 2, %s17
          %s356 = ssub.s32 256, 256
          %357 = vsyncadd %s347, %s356
          %s358 = smul.addr %s354, 2
          %s359 = smul.addr %s358, 64
          %s360 = scalar_lea.hbm %s3, %s359
          %s361 = sshll.u32 %s350, 4
          %s362 = int_to_ptr.vmem [resolvable:$true] %s361
          %367 = dma.vmem_to_hbm [thread:$0]  %s362, 256, %s360, %s347, 128, 128, 8
        $region36: #{multimodal_projector.1} parent=31 // pred_fallthru
          _
      $region32: #{multimodal_projector.1} parent=5 // pred_fallthru
        _
      %p368 = scmp.le.s32.totalorder 2, %s12
      // Predicated region
      $region37: #{multimodal_projector.1} parent=5 // pred_check
        %p369 = pneg %p368
      $region38: #{multimodal_projector.1} parent=5 // pred_check_branch
        %371 = sbr.rel (%p369) target = $region40
      $region39: #{multimodal_projector.1} parent=5 // pred_region
        %s372 = ssub.s32 %s12, 2
        // Predicated region
        $region41: #{multimodal_projector.1} parent=39 // pred_check
          %p373 = pneg %p109
        $region42: #{multimodal_projector.1} parent=39 // pred_check_branch
          %375 = sbr.rel (%p373) target = $region44
        $region43: #{multimodal_projector.1} parent=39 // pred_region
          %s376 = sand.u32 %s94, 1
          %s377 = scalar_lea.sflag [#allocation3], %s376
          %s378 = sand.u32 %s94, 1
          %s379 = smul.addr %s378, 16
          %s380 = scalar_lea.vmem [#allocation2], %s379
          %381 = dma.done %s377, 256
        $region44: #{multimodal_projector.1} parent=39 // pred_fallthru
          _
      $region40: #{multimodal_projector.1} parent=5 // pred_fallthru
        _
    $region6: #{multimodal_projector.1} parent=1 // loop_footer
      %s16 = sadd.s32 1, %s12
    $region7: #{multimodal_projector.1} parent=1 // loop_footer_branch
      %11 = sbr.rel target = $region3
    $region8: #{multimodal_projector.1} parent=1 // loop_exit
      _
    %382 = vsyncpa [#allocation3], 1
    %s383 = scalar_lea.sflag [#allocation3], 1
    %384 = vsyncpa %s383, 1

</llo_original>
